<compile_context>
chip_gen: v5e
topology: v5e:2x2
jax: 0.10.0
libtpu: 0.0.40
codegen_flags: <defaults>
</compile_context>

<pallas_src>
import jax
import jax.numpy as jnp
from jax.experimental import pallas as pl
from jax.experimental.pallas import tpu as pltpu


def _round_up(a: int, b: int) -> int:
    return ((a + b - 1) // b) * b


def quantized_linear_kernel(qp_ref, x_ref, w_ref, b_ref, o_ref):
    """One (i, j, k) grid step of  xq @ w  (+ bias, output fake-quant).

    qp_ref (SMEM, f32[5]): [outS, outZP, outQn, outQp, 1/outS]
    x_ref  (tm, tk) compute_dtype -- already input-fake-quantized in wrapper
    w_ref  (tk, tn) compute_dtype
    b_ref  (1,  tn) f32
    o_ref  (tm, tn) f32 -- resident across the k axis (index_map ignores k);
                           used directly as the accumulator (no VMEM scratch).
    """
    k = pl.program_id(2)

    partial = jnp.dot(x_ref[...], w_ref[...],
                      preferred_element_type=jnp.float32)

    @pl.when(k == 0)
    def _init():
        o_ref[...] = partial

    @pl.when(k > 0)
    def _accum():
        o_ref[...] += partial

    # Epilogue on the last K step: bias + output fake-quant, in place.
    @pl.when(k == pl.num_programs(2) - 1)
    def _finalize():
        out_s, out_zp = qp_ref[0], qp_ref[1]
        out_qn, out_qp = qp_ref[2], qp_ref[3]
        inv_out_s = qp_ref[4]
        y = o_ref[...] + b_ref[...]          # b_ref broadcasts over rows
        q = jnp.round(jnp.clip(y * inv_out_s + out_zp, out_qn, out_qp))
        o_ref[...] = out_s * (q - out_zp)


def quantized_linear(x2d, w, b, qparams, *, tm=512, tn=512, tk=1024,
                     compute_dtype=jnp.bfloat16):
    """Fused fake-quant -> (x @ w + b) -> fake-quant.

    x2d: [M, K] f32, w: [K, N] (== torch weight.T), b: [N],
    qparams: f32[8] = [inS, inZP, inQn, inQp, outS, outZP, outQn, outQp].
    Tile defaults target v6e/v7x; on v5e start from tm=128-256, tn=256-512.
    Call under jax.jit so the input fake-quant / pad / cast fuse.
    """
    M, K = x2d.shape
    Kw, N = w.shape
    assert Kw == K and b.shape == (N,)

    qp = jnp.asarray(qparams, jnp.float32)
    in_s, in_zp, in_qn, in_qp = qp[0], qp[1], qp[2], qp[3]

    # ---- input fake-quant, hoisted out of the kernel's (i, j, k) loop ------
    # Runs once per element; padded K columns stay exactly zero because the
    # quant is applied before padding (and padded w rows are zero anyway).
    inv_in_s = 1.0 / in_s
    xq = in_s * (jnp.round(jnp.clip(x2d * inv_in_s + in_zp, in_qn, in_qp))
                 - in_zp)

    # ---- tile selection (keep (8,128) alignment, clamp to problem size) ----
    tm = min(tm, _round_up(M, 8))
    tn = min(tn, _round_up(N, 128))
    tk = min(tk, _round_up(K, 128))
    Mp, Np, Kp = _round_up(M, tm), _round_up(N, tn), _round_up(K, tk)

    # v7x megacore: make sure the parallel (i, j) grid has >= 2 blocks so both
    # TensorCores get work; prefer splitting N (keeps lane-dense stores).
    if (Mp // tm) * (Np // tn) < 2:
        tn_half = _round_up((tn + 1) // 2, 128)
        if tn_half < tn:
            tn = tn_half
            Np = _round_up(N, tn)

    # ---- operand prep (no f32 weight intermediate; skip pads when aligned) -
    xq = xq.astype(compute_dtype)
    if (Mp, Kp) != (M, K):
        xq = jnp.pad(xq, ((0, Mp - M), (0, Kp - K)))
    wp = w if w.dtype == compute_dtype else w.astype(compute_dtype)
    if (Kp, Np) != (K, N):
        wp = jnp.pad(wp, ((0, Kp - K), (0, Np - N)))
    bp = b.astype(jnp.float32)
    if Np != N:
        bp = jnp.pad(bp, (0, Np - N))
    bp = bp.reshape(1, Np)

    # Output-quant scalars (+ precomputed reciprocal) for SMEM.
    qp_out = jnp.stack([qp[4], qp[5], qp[6], qp[7], 1.0 / qp[4]])

    grid = (Mp // tm, Np // tn, Kp // tk)
    n_i, n_j = grid[0], grid[1]

    # VMEM budget from actual buffer bytes (double-buffered tiles) + headroom.
    elt = jnp.dtype(compute_dtype).itemsize
    buf_bytes = 2 * (tm * tk * elt + tk * tn * elt + tn * 4 + tm * tn * 4)
    vmem_limit = int(min(max(int(buf_bytes * 1.5), 16 * 1024 * 1024),
                         120 * 1024 * 1024))

    cost = pl.CostEstimate(
        flops=2 * Mp * Np * Kp + 7 * Mp * Np,
        transcendentals=0,
        bytes_accessed=(Mp * Kp * elt * n_j       # x streamed once per N tile
                        + Kp * Np * elt * n_i     # w streamed once per M tile
                        + Np * 4 * n_i
                        + Mp * Np * 4),
    )

    out = pl.pallas_call(
        quantized_linear_kernel,
        out_shape=jax.ShapeDtypeStruct((Mp, Np), jnp.float32),
        grid=grid,
        in_specs=[
            pl.BlockSpec(memory_space=pltpu.MemorySpace.SMEM),   # out-quant scalars
            pl.BlockSpec((tm, tk), lambda i, j, k: (i, k)),      # xq tile (bf16)
            pl.BlockSpec((tk, tn), lambda i, j, k: (k, j)),      # w tile (bf16)
            pl.BlockSpec((1, tn), lambda i, j, k: (0, j)),       # bias tile
        ],
        out_specs=pl.BlockSpec((tm, tn), lambda i, j, k: (i, j)),
        compiler_params=pltpu.CompilerParams(
            dimension_semantics=("parallel", "parallel", "arbitrary"),
            vmem_limit_bytes=vmem_limit,
        ),
        cost_estimate=cost,
    )(qp_out, xq, wp, bp)

    return out[:M, :N]


def quantized_layer_forward(x, w, b, qparams, **kwargs):
    """x: [B, S, H_in] -> [B, S, H_out]."""
    B, S, H_in = x.shape
    H_out = w.shape[1]
    y = quantized_linear(x.reshape(B * S, H_in), w, b, qparams, **kwargs)
    return y.reshape(B, S, H_out)


# ----------------------------- references ----------------------------------

def _reference_f32(x, w, b, qparams):
    """Exact f32 mirror of the PyTorch module (with org_module = Linear)."""
    (in_s, in_zp, in_qn, in_qp,
     out_s, out_zp, out_qn, out_qp) = [qparams[i] for i in range(8)]
    xq = in_s * (jnp.round(jnp.clip(x / in_s + in_zp, in_qn, in_qp)) - in_zp)
    y = jnp.einsum("bsk,kn->bsn", xq, w) + b
    return out_s * (jnp.round(jnp.clip(y / out_s + out_zp, out_qn, out_qp)) - out_zp)


def _reference_matched(x, w, b, qparams, compute_dtype):
    """Same math, but with the kernel's low-precision MXU operands."""
    (in_s, in_zp, in_qn, in_qp,
     out_s, out_zp, out_qn, out_qp) = [qparams[i] for i in range(8)]
    xq = in_s * (jnp.round(jnp.clip(x / in_s + in_zp, in_qn, in_qp)) - in_zp)
    y = jnp.einsum("bsk,kn->bsn", xq.astype(compute_dtype),
                   w.astype(compute_dtype),
                   preferred_element_type=jnp.float32) + b
    return out_s * (jnp.round(jnp.clip(y / out_s + out_zp, out_qn, out_qp)) - out_zp)


if __name__ == "__main__":
    B, S, H_IN, H_OUT = 2, 8, 32, 32

    key = jax.random.PRNGKey(0)
    kx, kw, kb = jax.random.split(key, 3)
    x = jax.random.normal(kx, (B, S, H_IN), dtype=jnp.float32)
    # deterministic "Linear" params (torch stores weight [out, in]; we store its T)
    w = jax.random.normal(kw, (H_IN, H_OUT), dtype=jnp.float32) * 0.1
    b = jax.random.normal(kb, (H_OUT,), dtype=jnp.float32) * 0.1

    # int8-style fake quantization on input and output (power-of-two scales,
    # zero-point 0 -> reciprocal scaling and bf16 cast are exact).
    IN_S, OUT_S = 0.0625, 0.125
    qparams = jnp.array(
        [IN_S, 0.0, -128.0, 127.0,    # inS, inZP, inQn, inQp
         OUT_S, 0.0, -128.0, 127.0],  # outS, outZP, outQn, outQp
        dtype=jnp.float32)

    fwd = jax.jit(quantized_layer_forward)
    out = fwd(x, w, b, qparams)
    jax.block_until_ready(out)
    assert out.shape == (B, S, H_OUT)

    # Precision-matched check (same bf16 MXU operands, f32 accumulation).
    ref_m = _reference_matched(x, w, b, qparams, jnp.bfloat16)
    assert jnp.allclose(out, ref_m, atol=1e-3, rtol=1e-3), \
        float(jnp.max(jnp.abs(out - ref_m)))

    # Loose sanity check against the exact f32 torch semantics: the bf16
    # matmul can shift the output fake-quant by at most one quant step.
    ref_f = _reference_f32(x, w, b, qparams)
    assert float(jnp.max(jnp.abs(out - ref_f))) <= OUT_S * 1.01

    print("KERNEL_OK")
</pallas_src>

<mosaic_0001>
module attributes {stable_mosaic.version = 11 : i64} {
  func.func @quantized_linear_kernel(%arg0: i32, %arg1: i32, %arg2: i32, %arg3: memref<5xf32, #tpu.memory_space<smem>>, %arg4: memref<16x128xbf16, #tpu.memory_space<vmem>>, %arg5: memref<128x128xbf16, #tpu.memory_space<vmem>>, %arg6: memref<1x128xf32, #tpu.memory_space<vmem>>, %arg7: memref<16x128xf32, #tpu.memory_space<vmem>>) attributes {dimension_semantics = [#tpu.dimension_semantics<parallel>, #tpu.dimension_semantics<parallel>, #tpu.dimension_semantics<arbitrary>], iteration_bounds = array<i64: 1, 1, 1>, scalar_prefetch = 0 : i64, scratch_operands = 0 : i64, tpu.core_type = #tpu.core_type<tc>, window_params = [{transform_indices = @transform_0, window_bounds = array<i64: 5>}, {transform_indices = @transform_1, window_bounds = array<i64: 16, 128>}, {transform_indices = @transform_2, window_bounds = array<i64: 128, 128>}, {transform_indices = @transform_3, window_bounds = array<i64: 1, 128>}, {transform_indices = @transform_4, window_bounds = array<i64: 16, 128>}]} {
    %c0 = arith.constant 0 : index
    %c0_0 = arith.constant 0 : index
    %0 = vector.load %arg4[%c0, %c0_0] : memref<16x128xbf16, #tpu.memory_space<vmem>>, vector<16x128xbf16>
    %c0_1 = arith.constant 0 : index
    %c0_2 = arith.constant 0 : index
    %1 = vector.load %arg5[%c0_1, %c0_2] : memref<128x128xbf16, #tpu.memory_space<vmem>>, vector<128x128xbf16>
    %cst = arith.constant dense<0.000000e+00> : vector<16x128xf32>
    %2 = tpu.matmul %0, %1, %cst {dimension_numbers = #tpu.dot_dimension_numbers<[1], [0], [0], [1], [0, 0, 1, 1], [], []>} : vector<16x128xbf16>, vector<128x128xbf16>, vector<16x128xf32> -> vector<16x128xf32>
    %c0_i32 = arith.constant 0 : i32
    %3 = arith.cmpi eq, %arg2, %c0_i32 : i32
    %4 = arith.extui %3 : i1 to i32
    %c0_i32_3 = arith.constant 0 : i32
    %5 = arith.cmpi ne, %4, %c0_i32_3 : i32
    scf.if %5 {
      %c0_8 = arith.constant 0 : index
      %c0_9 = arith.constant 0 : index
      %12 = vector.load %arg7[%c0_8, %c0_9] : memref<16x128xf32, #tpu.memory_space<vmem>>, vector<16x128xf32>
      tpu.vector_store %arg7[%c0_8, %c0_9], %2 {strides = array<i32>} : memref<16x128xf32, #tpu.memory_space<vmem>>, vector<16x128xf32>,
    } else {
    }
    %c0_i32_4 = arith.constant 0 : i32
    %6 = arith.cmpi sgt, %arg2, %c0_i32_4 : i32
    %7 = arith.extui %6 : i1 to i32
    %c0_i32_5 = arith.constant 0 : i32
    %8 = arith.cmpi ne, %7, %c0_i32_5 : i32
    scf.if %8 {
      %c0_8 = arith.constant 0 : index
      %c0_9 = arith.constant 0 : index
      %12 = vector.load %arg7[%c0_8, %c0_9] : memref<16x128xf32, #tpu.memory_space<vmem>>, vector<16x128xf32>
      %13 = arith.addf %12, %2 : vector<16x128xf32>
      %c0_10 = arith.constant 0 : index
      %c0_11 = arith.constant 0 : index
      %14 = vector.load %arg7[%c0_10, %c0_11] : memref<16x128xf32, #tpu.memory_space<vmem>>, vector<16x128xf32>
      tpu.vector_store %arg7[%c0_10, %c0_11], %13 {strides = array<i32>} : memref<16x128xf32, #tpu.memory_space<vmem>>, vector<16x128xf32>,
    } else {
    }
    %c0_i32_6 = arith.constant 0 : i32
    %9 = arith.cmpi eq, %arg2, %c0_i32_6 : i32
    %10 = arith.extui %9 : i1 to i32
    %c0_i32_7 = arith.constant 0 : i32
    %11 = arith.cmpi ne, %10, %c0_i32_7 : i32
    scf.if %11 {
      %c0_8 = arith.constant 0 : index
      %12 = memref.load %arg3[%c0_8] : memref<5xf32, #tpu.memory_space<smem>>
      %c1 = arith.constant 1 : index
      %13 = memref.load %arg3[%c1] : memref<5xf32, #tpu.memory_space<smem>>
      %c2 = arith.constant 2 : index
      %14 = memref.load %arg3[%c2] : memref<5xf32, #tpu.memory_space<smem>>
      %c3 = arith.constant 3 : index
      %15 = memref.load %arg3[%c3] : memref<5xf32, #tpu.memory_space<smem>>
      %c4 = arith.constant 4 : index
      %16 = memref.load %arg3[%c4] : memref<5xf32, #tpu.memory_space<smem>>
      %c0_9 = arith.constant 0 : index
      %c0_10 = arith.constant 0 : index
      %17 = vector.load %arg7[%c0_9, %c0_10] : memref<16x128xf32, #tpu.memory_space<vmem>>, vector<16x128xf32>
      %c0_11 = arith.constant 0 : index
      %c0_12 = arith.constant 0 : index
      %18 = vector.load %arg6[%c0_11, %c0_12] : memref<1x128xf32, #tpu.memory_space<vmem>>, vector<1x128xf32>
      %19 = vector.broadcast %18 : vector<1x128xf32> to vector<16x128xf32>
      %20 = arith.addf %17, %19 : vector<16x128xf32>
      %21 = vector.broadcast %16 : f32 to vector<16x128xf32>
      %22 = arith.mulf %20, %21 : vector<16x128xf32>
      %23 = vector.broadcast %13 : f32 to vector<16x128xf32>
      %24 = arith.addf %22, %23 : vector<16x128xf32>
      %25 = vector.broadcast %14 : f32 to vector<16x128xf32>
      %26 = arith.maximumf %25, %24 : vector<16x128xf32>
      %27 = vector.broadcast %15 : f32 to vector<16x128xf32>
      %28 = arith.minimumf %27, %26 : vector<16x128xf32>
      %29 = math.roundeven %28 : vector<16x128xf32>
      %30 = vector.broadcast %13 : f32 to vector<16x128xf32>
      %31 = arith.subf %29, %30 : vector<16x128xf32>
      %32 = vector.broadcast %12 : f32 to vector<16x128xf32>
      %33 = arith.mulf %32, %31 : vector<16x128xf32>
      %c0_13 = arith.constant 0 : index
      %c0_14 = arith.constant 0 : index
      %34 = vector.load %arg7[%c0_13, %c0_14] : memref<16x128xf32, #tpu.memory_space<vmem>>, vector<16x128xf32>
      tpu.vector_store %arg7[%c0_13, %c0_14], %33 {strides = array<i32>} : memref<16x128xf32, #tpu.memory_space<vmem>>, vector<16x128xf32>,
    } else {
    }
    return
  }
  func.func @transform_0(%arg0: i32, %arg1: i32, %arg2: i32) -> i32 {
    %c0_i32 = arith.constant 0 : i32
    %c0_i32_0 = arith.constant 0 : i32
    return %c0_i32 : i32
  }
  func.func @transform_1(%arg0: i32, %arg1: i32, %arg2: i32) -> (i32, i32) {
    %c0_i32 = arith.constant 0 : i32
    return %arg0, %arg2 : i32, i32
  }
  func.func @transform_2(%arg0: i32, %arg1: i32, %arg2: i32) -> (i32, i32) {
    %c0_i32 = arith.constant 0 : i32
    return %arg2, %arg1 : i32, i32
  }
  func.func @transform_3(%arg0: i32, %arg1: i32, %arg2: i32) -> (i32, i32) {
    %c0_i32 = arith.constant 0 : i32
    %c0_i32_0 = arith.constant 0 : i32
    return %c0_i32, %arg1 : i32, i32
  }
  func.func @transform_4(%arg0: i32, %arg1: i32, %arg2: i32) -> (i32, i32) {
    %c0_i32 = arith.constant 0 : i32
    return %arg0, %arg1 : i32, i32
  }
}

</mosaic_0001>

<llo_original>
// kernel: quantized_layer_forward.1
$region0: #{quantized_layer_forward.1}
  #allocation0 [shape = 'u32[]', space=smem, size = 0x4, offset = 0x4, fixed_abs, tag = 'smem constant byte address 0x4 - core index']
  #allocation1 [shape = 'u32[72,128]{1,0:T(1,128)}', space=vmem, size = 0x9000, scoped, tag = 'internal scratch']
  %s0 = inlined_call_operand.vmem [shape: f32[5], index: 0, kind: input, shape index: {}]
  %s1 = inlined_call_operand.vmem [shape: bf16[16,128], index: 1, kind: input, shape index: {}]
  %s2 = inlined_call_operand.vmem [shape: bf16[128,128], index: 2, kind: input, shape index: {}]
  %s3 = inlined_call_operand.vmem [shape: f32[1,128], index: 3, kind: input, shape index: {}]
  %s4 = inlined_call_operand.vmem [shape: f32[16,128], index: 4, kind: output, shape index: {}]
  %s5 = sld [smem:[#allocation0]]
  $region42: #{quantized_layer_forward.1} parent=0
    _
  %s7 = ssub.s32 1, %s5
  %s8 = scalar_select 0, %s7, %s5
  $region1: #{quantized_layer_forward.1} parent=0
    #allocation2 [shape = 'u8[512]{0}', space=smem, size = 0x200, scoped, tag = 'input window, operand 0, single buffered']
    #allocation3 [shape = 's32[1]{0}', space=sflag, size = 0x4, scoped, tag = 'scoped memory for quantized_layer_forward.1']
    %9 = vsyncpa [#allocation3], 0
    // Predicated region
    $region2: #{quantized_layer_forward.1} parent=1 // pred_check
      _
    $region3: #{quantized_layer_forward.1} parent=1 // pred_check_branch
      %11 = sbr.rel (0) target = $region5
    $region4: #{quantized_layer_forward.1} parent=1 // pred_region
      %13 = vsyncadd [#allocation3], 0
      %s15 = sshll.u32 %s0, 4
      %s16 = int_to_ptr.vmem [resolvable:$true] %s15
      %18 = dma.vmem_to_smem %s16, 16, [#allocation2], [#allocation3]
    $region5: #{quantized_layer_forward.1} parent=1 // pred_fallthru
      _
    // Predicated region
    $region6: #{quantized_layer_forward.1} parent=1 // pred_check
      _
    $region7: #{quantized_layer_forward.1} parent=1 // pred_check_branch
      %20 = sbr.rel (0) target = $region9
    $region8: #{quantized_layer_forward.1} parent=1 // pred_region
      _
    $region9: #{quantized_layer_forward.1} parent=1 // pred_fallthru
      _
    // Predicated region
    $region10: #{quantized_layer_forward.1} parent=1 // pred_check
      _
    $region11: #{quantized_layer_forward.1} parent=1 // pred_check_branch
      %22 = sbr.rel (0) target = $region13
    $region12: #{quantized_layer_forward.1} parent=1 // pred_region
      _
    $region13: #{quantized_layer_forward.1} parent=1 // pred_fallthru
      _
    // Predicated region
    $region14: #{quantized_layer_forward.1} parent=1 // pred_check
      _
    $region15: #{quantized_layer_forward.1} parent=1 // pred_check_branch
      %24 = sbr.rel (0) target = $region17
    $region16: #{quantized_layer_forward.1} parent=1 // pred_region
      _
    $region17: #{quantized_layer_forward.1} parent=1 // pred_fallthru
      _
    // Predicated region
    $region18: #{quantized_layer_forward.1} parent=1 // pred_check
      _
    $region19: #{quantized_layer_forward.1} parent=1 // pred_check_branch
      %26 = sbr.rel (0) target = $region21
    $region20: #{quantized_layer_forward.1} parent=1 // pred_region
      %28 = dma.done [#allocation3], 16
    $region21: #{quantized_layer_forward.1} parent=1 // pred_fallthru
      _
    %29 = sfence
    %v30 = vld [vmem:[%s1] sm:$0xf]
    %v31 = vld [vmem:[%s1 + $0x4] sm:$0xf]
    %v32 = vld [vmem:[%s2] sm:$0xf]
    %v33 = vld [vmem:[%s2 + $0x4] sm:$0xf]
    %v34 = vld [vmem:[%s2 + $0x8] sm:$0xf]
    %v35 = vld [vmem:[%s2 + $0xc] sm:$0xf]
    %v36 = vld [vmem:[%s2 + $0x10] sm:$0xf]
    %v37 = vld [vmem:[%s2 + $0x14] sm:$0xf]
    %v38 = vld [vmem:[%s2 + $0x18] sm:$0xf]
    %v39 = vld [vmem:[%s2 + $0x1c] sm:$0xf]
    %v40 = vld [vmem:[%s2 + $0x20] sm:$0xf]
    %v41 = vld [vmem:[%s2 + $0x24] sm:$0xf]
    %v42 = vld [vmem:[%s2 + $0x28] sm:$0xf]
    %v43 = vld [vmem:[%s2 + $0x2c] sm:$0xf]
    %v44 = vld [vmem:[%s2 + $0x30] sm:$0xf]
    %v45 = vld [vmem:[%s2 + $0x34] sm:$0xf]
    %v46 = vld [vmem:[%s2 + $0x38] sm:$0xf]
    %v47 = vld [vmem:[%s2 + $0x3c] sm:$0xf]
    %v50 = vunpack.c.l.b16 %v30
    %v51 = vunpack.c.l.b16 %v31
    %v52 = vpack.c.b16 %v51, %v50
    %v70 = vunpack.c.l.b16 %v32
    %v71 = vunpack.c.l.b16 %v33
    %v72 = vunpack.c.l.b16 %v34
    %v73 = vunpack.c.l.b16 %v35
    %v74 = vunpack.c.l.b16 %v36
    %v75 = vunpack.c.l.b16 %v37
    %v76 = vunpack.c.l.b16 %v38
    %v77 = vunpack.c.l.b16 %v39
    %v78 = vunpack.c.l.b16 %v40
    %v79 = vunpack.c.l.b16 %v41
    %v80 = vunpack.c.l.b16 %v42
    %v81 = vunpack.c.l.b16 %v43
    %v82 = vunpack.c.l.b16 %v44
    %v83 = vunpack.c.l.b16 %v45
    %v84 = vunpack.c.l.b16 %v46
    %v85 = vunpack.c.l.b16 %v47
    %v86 = vpack.c.b16 %v71, %v70
    %v87 = vpack.c.b16 %v73, %v72
    %v88 = vpack.c.b16 %v75, %v74
    %v89 = vpack.c.b16 %v77, %v76
    %v90 = vpack.c.b16 %v79, %v78
    %v91 = vpack.c.b16 %v81, %v80
    %v92 = vpack.c.b16 %v83, %v82
    %v93 = vpack.c.b16 %v85, %v84
    %102 = vmatpush.bf16.msra.mxu0 %v93
    %103 = vmatpush.bf16.msra.mxu0 %v92
    %104 = vmatpush.bf16.msra.mxu0 %v91
    %105 = vmatpush.bf16.msra.mxu0 %v90
    %106 = vmatpush.bf16.msra.mxu0 %v89
    %107 = vmatpush.bf16.msra.mxu0 %v88
    %108 = vmatpush.bf16.msra.mxu0 %v87
    %109 = vmatpush.bf16.msra.mxu0 %v86
    %110 = vmatmul.bf16.gmra.mxu0 %v52
    %v111 = vpop.f32.mrf.mxu0
    %v112 = vadd.f32 0.0, %v111
    %v113 = vpop.f32.mrf.mxu0
    %v114 = vadd.f32 0.0, %v113
    %115 = vdwg.mxu0
    %p116 = scmp.eq.s32.totalorder 0, 0
    // Predicated region
    $region22: #{quantized_layer_forward.1} parent=1 // pred_check
      %p117 = pneg %p116
    $region23: #{quantized_layer_forward.1} parent=1 // pred_check_branch
      %119 = sbr.rel (%p117) target = $region25
    $region24: #{quantized_layer_forward.1} parent=1 // pred_region
      %120 = vst [vmem:[%s4] sm:$0xff] %v112
      %121 = vst [vmem:[%s4 + $0x8] sm:$0xff] %v114
    $region25: #{quantized_layer_forward.1} parent=1 // pred_fallthru
      _
    %p122 = scmp.gt.s32.totalorder 0, 0
    // Predicated region
    $region26: #{quantized_layer_forward.1} parent=1 // pred_check
      %p123 = pneg %p122
    $region27: #{quantized_layer_forward.1} parent=1 // pred_check_branch
      %125 = sbr.rel (%p123) target = $region29
    $region28: #{quantized_layer_forward.1} parent=1 // pred_region
      %v126 = vld [vmem:[%s4] sm:$0xff]
      %v127 = vld [vmem:[%s4 + $0x8] sm:$0xff]
      %v128 = vadd.f32 %v126, %v112
      %v129 = vadd.f32 %v127, %v114
      %130 = vst [vmem:[%s4] sm:$0xff] %v128
      %131 = vst [vmem:[%s4 + $0x8] sm:$0xff] %v129
    $region29: #{quantized_layer_forward.1} parent=1 // pred_fallthru
      _
    // Predicated region
    $region30: #{quantized_layer_forward.1} parent=1 // pred_check
      %p132 = pneg %p116
    $region31: #{quantized_layer_forward.1} parent=1 // pred_check_branch
      %134 = sbr.rel (%p132) target = $region33
    $region32: #{quantized_layer_forward.1} parent=1 // pred_region
      %s135 = sld [smem:[#allocation2]]
      %s136 = sld [smem:[#allocation2 + $0x1]]
      %s137 = sld [smem:[#allocation2 + $0x2]]
      %s138 = sld [smem:[#allocation2 + $0x3]]
      %s139 = sld [smem:[#allocation2 + $0x4]]
      %v140 = vld [vmem:[%s4] sm:$0xff]
      %v141 = vld [vmem:[%s4 + $0x8] sm:$0xff]
      %v142 = vld [vmem:[%s3] sm:$0x1]
      %v144 = vperm.slane %v142, 0
      %v146 = vadd.f32 %v140, %v144
      %v147 = vadd.f32 %v141, %v144
      %v148 = vstv %s139
      %v149 = vmul.f32 %v146, %v148
      %v150 = vmul.f32 %v147, %v148
      %v151 = vstv %s136
      %v152 = vadd.f32 %v149, %v151
      %v153 = vadd.f32 %v150, %v151
      %v154 = vstv %s137
      %v155 = vmax.f32 %v154, %v152
      %v156 = vmax.f32 %v154, %v153
      %v157 = vstv %s138
      %v158 = vmin.f32 %v157, %v155
      %v159 = vmin.f32 %v157, %v156
      %v160 = vround.ne.pseudo %v158
      %v161 = vround.ne.pseudo %v159
      %v162 = vsub.f32 %v160, %v151
      %v163 = vsub.f32 %v161, %v151
      %v164 = vstv %s135
      %v165 = vmul.f32 %v164, %v162
      %v166 = vmul.f32 %v164, %v163
      %167 = vst [vmem:[%s4] sm:$0xff] %v165
      %168 = vst [vmem:[%s4 + $0x8] sm:$0xff] %v166
    $region33: #{quantized_layer_forward.1} parent=1 // pred_fallthru
      _
    // Predicated region
    $region34: #{quantized_layer_forward.1} parent=1 // pred_check
      _
    $region35: #{quantized_layer_forward.1} parent=1 // pred_check_branch
      %170 = sbr.rel (0) target = $region37
    $region36: #{quantized_layer_forward.1} parent=1 // pred_region
      _
    $region37: #{quantized_layer_forward.1} parent=1 // pred_fallthru
      _
    // Predicated region
    $region38: #{quantized_layer_forward.1} parent=1 // pred_check
      _
    $region39: #{quantized_layer_forward.1} parent=1 // pred_check_branch
      %172 = sbr.rel (0) target = $region41
    $region40: #{quantized_layer_forward.1} parent=1 // pred_region
      _
    $region41: #{quantized_layer_forward.1} parent=1 // pred_fallthru
      _
    %173 = vsyncpa [#allocation3], 1

</llo_original>
